<compile_context>
chip_gen: v7x
topology: tpu7x:2x2x1
jax: 0.10.0
libtpu: 0.0.40
codegen_flags: <defaults>
</compile_context>

<pallas_src>
import math
import functools

import jax
import jax.numpy as jnp
from jax import lax
from jax.experimental import pallas as pl
from jax.experimental.pallas import tpu as pltpu


# ----------------------------- Linear kernel ------------------------------- #
def _linear_kernel(x_ref, w_ref, b_ref, o_ref):
    # x: (tm, K) bf16, w: (tn, K) bf16 (PyTorch (out,in) layout -> no transpose),
    # b: (1, tn) f32, o: (tm, tn).  Contract over K with the RHS already "NT".
    y = lax.dot_general(
        x_ref[...], w_ref[...],
        dimension_numbers=(((1,), (1,)), ((), ())),
        preferred_element_type=jnp.float32)
    o_ref[...] = (y + b_ref[...]).astype(o_ref.dtype)


def linear_pallas(x2d, weight, bias, *, out_dtype=jnp.float32,
                  tm_pref=256, tn_pref=256):
    """x2d: (M, K); weight: (N, K) PyTorch (out, in) convention; bias: (N,).

    Tiled over (M, N) with both grid axes parallel (megacore-shardable) so the
    BlockSpec pipeline double-buffers the DMAs. 256-wide tiles keep the
    double-buffered working set well under the 32 MiB scoped VMEM default on
    v5e/v6e/v7x (halve tm_pref/tn_pref further on v7x if K grows very large).
    """
    M, K = x2d.shape
    N = weight.shape[0]

    xb = x2d.astype(jnp.bfloat16)          # bf16 in, f32 accumulate on the MXU
    wb = weight.astype(jnp.bfloat16)
    b2d = bias.reshape(1, N).astype(jnp.float32)

    tm = M if M <= tm_pref else tm_pref
    tn = N if N <= tn_pref else tn_pref
    grid = (pl.cdiv(M, tm), pl.cdiv(N, tn))
    # TODO(synk): add a K grid axis + f32 accumulator scratch if K gets large.
    return pl.pallas_call(
        _linear_kernel,
        out_shape=jax.ShapeDtypeStruct((M, N), out_dtype),
        grid=grid,
        in_specs=[
            pl.BlockSpec((tm, K), lambda i, j: (i, 0)),
            pl.BlockSpec((tn, K), lambda i, j: (j, 0)),
            pl.BlockSpec((1, tn), lambda i, j: (0, j)),
        ],
        out_specs=pl.BlockSpec((tm, tn), lambda i, j: (i, j)),
        compiler_params=pltpu.CompilerParams(
            dimension_semantics=("parallel", "parallel")),
    )(xb, wb, b2d)


# --------------------------- Attention kernel ------------------------------ #
def _mha_attention_kernel(q_ref, k_ref, v_ref, o_ref, *, num_heads):
    # Blocks are (1, S, d_model): one batch element, ALL heads per grid step
    # (lane-dense loads/stores). Heads are handled with static lane slices,
    # so no transposes / reshapes are needed inside the kernel.
    _, S, d_model = q_ref.shape
    d_k = d_model // num_heads
    scale = 1.0 / math.sqrt(d_k)
    for h in range(num_heads):                         # static unroll (small H)
        sl = slice(h * d_k, (h + 1) * d_k)
        qh = q_ref[0, :, sl] * scale                   # (S, d_k) bf16, scale folded into q
        kh = k_ref[0, :, sl]                           # (S, d_k)
        vh = v_ref[0, :, sl]                           # (S, d_k)
        # scores = qh @ kh^T, expressed as an NT dot_general (no k transpose op).
        s = lax.dot_general(
            qh, kh, dimension_numbers=(((1,), (1,)), ((), ())),
            preferred_element_type=jnp.float32)        # (S, S) f32
        # numerically-stable softmax, kept in f32 on the VPU/EUP
        s = s - jnp.max(s, axis=-1, keepdims=True)
        p = jnp.exp(s)
        p = p * pl.reciprocal(jnp.sum(p, axis=-1, keepdims=True), approx=True)
        oh = jnp.dot(p.astype(vh.dtype), vh,
                     preferred_element_type=jnp.float32)  # (S, d_k) f32 accum
        o_ref[0, :, sl] = oh.astype(o_ref.dtype)


def attention_pallas(q, k, v, num_heads, *, out_dtype=jnp.bfloat16):
    """q, k, v: (B, S, d_model) with heads packed on the last axis -> same shape."""
    B, S, d_model = q.shape
    kern = functools.partial(_mha_attention_kernel, num_heads=num_heads)
    spec = pl.BlockSpec((1, S, d_model), lambda b: (b, 0, 0))
    return pl.pallas_call(
        kern,
        out_shape=jax.ShapeDtypeStruct((B, S, d_model), out_dtype),
        grid=(B,),
        in_specs=[spec, spec, spec],
        out_specs=spec,
        compiler_params=pltpu.CompilerParams(dimension_semantics=("parallel",)),
    )(q.astype(jnp.bfloat16), k.astype(jnp.bfloat16), v.astype(jnp.bfloat16))


# ------------------------- MultiHeadedAttention ----------------------------- #
def init_mha_params(key, h, d_model):
    """4 nn.Linear(d_model, d_model) layers, uniform +/- 1/sqrt(fan_in) init."""
    bound = 1.0 / math.sqrt(d_model)
    params = []
    for _ in range(4):
        key, kw, kb = jax.random.split(key, 3)
        w = jax.random.uniform(kw, (d_model, d_model), jnp.float32, -bound, bound)
        b = jax.random.uniform(kb, (d_model,), jnp.float32, -bound, bound)
        params.append((w, b))
    return params


@functools.partial(jax.jit, static_argnums=(4, 5))
def multi_headed_attention(query, key, value, params, h, d_model):
    """query/key/value: (B, S, d_model). Returns (B, S, d_model)."""
    B, S, _ = query.shape
    out_dtype = query.dtype

    # Q/K/V projections: keep outputs in bf16 (halves HBM traffic into attention)
    # and in head-packed (B, S, d_model) layout -> the reshape below is free, so
    # there are NO HBM transposes around the attention kernel.
    # TODO(synk): when query is key is value (self-attention with a single tensor),
    # fuse the three projections into one (d_model x 3*d_model) linear.
    def project(x, wb):
        w, b = wb
        y = linear_pallas(x.reshape(B * S, d_model), w, b, out_dtype=jnp.bfloat16)
        return y.reshape(B, S, d_model)

    q = project(query, params[0])
    k = project(key, params[1])
    v = project(value, params[2])

    x = attention_pallas(q, k, v, h, out_dtype=jnp.bfloat16)   # (B, S, d_model)

    w_o, b_o = params[3]
    out = linear_pallas(x.reshape(B * S, d_model), w_o, b_o, out_dtype=out_dtype)
    return out.reshape(B, S, d_model)


# ---------------------------------- Main ------------------------------------ #
if __name__ == "__main__":
    h = 4
    d_model = 32
    B, S = 2, 8

    root = jax.random.PRNGKey(0)
    kp, kq, kk, kv = jax.random.split(root, 4)
    params = tuple(init_mha_params(kp, h, d_model))

    query = jax.random.normal(kq, (B, S, d_model), jnp.float32)
    key_ = jax.random.normal(kk, (B, S, d_model), jnp.float32)
    value = jax.random.normal(kv, (B, S, d_model), jnp.float32)

    out = multi_headed_attention(query, key_, value, params, h, d_model)
    jax.block_until_ready(out)
    assert out.shape == (B, S, d_model)
    assert bool(jnp.all(jnp.isfinite(out)))
    print("KERNEL_OK")
</pallas_src>

<mosaic_0001>
module attributes {stable_mosaic.version = 11 : i64} {
  func.func @_linear_kernel(%arg0: i32, %arg1: i32, %arg2: memref<16x32xbf16, #tpu.memory_space<vmem>>, %arg3: memref<32x32xbf16, #tpu.memory_space<vmem>>, %arg4: memref<1x32xf32, #tpu.memory_space<vmem>>, %arg5: memref<16x32xbf16, #tpu.memory_space<vmem>>) attributes {dimension_semantics = [#tpu.dimension_semantics<parallel>, #tpu.dimension_semantics<parallel>], iteration_bounds = array<i64: 1, 1>, scalar_prefetch = 0 : i64, scratch_operands = 0 : i64, tpu.core_type = #tpu.core_type<tc>, window_params = [{transform_indices = @transform_0, window_bounds = array<i64: 16, 32>}, {transform_indices = @transform_1, window_bounds = array<i64: 32, 32>}, {transform_indices = @transform_2, window_bounds = array<i64: 1, 32>}, {transform_indices = @transform_3, window_bounds = array<i64: 16, 32>}]} {
    %c0 = arith.constant 0 : index
    %c0_0 = arith.constant 0 : index
    %0 = vector.load %arg2[%c0, %c0_0] : memref<16x32xbf16, #tpu.memory_space<vmem>>, vector<16x32xbf16>
    %c0_1 = arith.constant 0 : index
    %c0_2 = arith.constant 0 : index
    %1 = vector.load %arg3[%c0_1, %c0_2] : memref<32x32xbf16, #tpu.memory_space<vmem>>, vector<32x32xbf16>
    %cst = arith.constant dense<0.000000e+00> : vector<16x32xf32>
    %2 = tpu.matmul %0, %1, %cst {dimension_numbers = #tpu.dot_dimension_numbers<[1], [1], [0], [0], [0, 0, 1, 0], [], []>} : vector<16x32xbf16>, vector<32x32xbf16>, vector<16x32xf32> -> vector<16x32xf32>
    %c0_3 = arith.constant 0 : index
    %c0_4 = arith.constant 0 : index
    %3 = vector.load %arg4[%c0_3, %c0_4] : memref<1x32xf32, #tpu.memory_space<vmem>>, vector<1x32xf32>
    %4 = vector.broadcast %3 : vector<1x32xf32> to vector<16x32xf32>
    %5 = arith.addf %2, %4 : vector<16x32xf32>
    %6 = arith.truncf %5 : vector<16x32xf32> to vector<16x32xbf16>
    %c0_5 = arith.constant 0 : index
    %c0_6 = arith.constant 0 : index
    %7 = vector.load %arg5[%c0_5, %c0_6] : memref<16x32xbf16, #tpu.memory_space<vmem>>, vector<16x32xbf16>
    tpu.vector_store %arg5[%c0_5, %c0_6], %6 {strides = array<i32>} : memref<16x32xbf16, #tpu.memory_space<vmem>>, vector<16x32xbf16>,
    return
  }
  func.func @transform_0(%arg0: i32, %arg1: i32) -> (i32, i32) {
    %c0_i32 = arith.constant 0 : i32
    %c0_i32_0 = arith.constant 0 : i32
    return %arg0, %c0_i32 : i32, i32
  }
  func.func @transform_1(%arg0: i32, %arg1: i32) -> (i32, i32) {
    %c0_i32 = arith.constant 0 : i32
    %c0_i32_0 = arith.constant 0 : i32
    return %arg1, %c0_i32 : i32, i32
  }
  func.func @transform_2(%arg0: i32, %arg1: i32) -> (i32, i32) {
    %c0_i32 = arith.constant 0 : i32
    %c0_i32_0 = arith.constant 0 : i32
    return %c0_i32, %arg1 : i32, i32
  }
  func.func @transform_3(%arg0: i32, %arg1: i32) -> (i32, i32) {
    %c0_i32 = arith.constant 0 : i32
    return %arg0, %arg1 : i32, i32
  }
}

module attributes {stable_mosaic.version = 11 : i64} {
  func.func @_mha_attention_kernel(%arg0: i32, %arg1: memref<1x8x32xbf16, #tpu.memory_space<vmem>>, %arg2: memref<1x8x32xbf16, #tpu.memory_space<vmem>>, %arg3: memref<1x8x32xbf16, #tpu.memory_space<vmem>>, %arg4: memref<1x8x32xbf16, #tpu.memory_space<vmem>>) attributes {dimension_semantics = [#tpu.dimension_semantics<parallel>], iteration_bounds = array<i64: 2>, scalar_prefetch = 0 : i64, scratch_operands = 0 : i64, tpu.core_type = #tpu.core_type<tc>, window_params = [{transform_indices = @transform_0, window_bounds = array<i64: 1, 8, 32>}, {transform_indices = @transform_1, window_bounds = array<i64: 1, 8, 32>}, {transform_indices = @transform_2, window_bounds = array<i64: 1, 8, 32>}, {transform_indices = @transform_3, window_bounds = array<i64: 1, 8, 32>}]} {
    %c0 = arith.constant 0 : index
    %c0_0 = arith.constant 0 : index
    %c0_1 = arith.constant 0 : index
    %0 = vector.load %arg1[%c0, %c0_0, %c0_1] : memref<1x8x32xbf16, #tpu.memory_space<vmem>>, vector<1x8x8xbf16>
    %1 = vector.shape_cast %0 : vector<1x8x8xbf16> to vector<8x8xbf16>
    %cst = arith.constant 3.535160e-01 : bf16
    %2 = vector.broadcast %cst : bf16 to vector<8x8xbf16>
    %3 = arith.mulf %1, %2 : vector<8x8xbf16>
    %c0_2 = arith.constant 0 : index
    %c0_3 = arith.constant 0 : index
    %c0_4 = arith.constant 0 : index
    %4 = vector.load %arg2[%c0_2, %c0_3, %c0_4] : memref<1x8x32xbf16, #tpu.memory_space<vmem>>, vector<1x8x8xbf16>
    %5 = vector.shape_cast %4 : vector<1x8x8xbf16> to vector<8x8xbf16>
    %c0_5 = arith.constant 0 : index
    %c0_6 = arith.constant 0 : index
    %c0_7 = arith.constant 0 : index
    %6 = vector.load %arg3[%c0_5, %c0_6, %c0_7] : memref<1x8x32xbf16, #tpu.memory_space<vmem>>, vector<1x8x8xbf16>
    %7 = vector.shape_cast %6 : vector<1x8x8xbf16> to vector<8x8xbf16>
    %cst_8 = arith.constant dense<0.000000e+00> : vector<8x8xf32>
    %8 = tpu.matmul %3, %5, %cst_8 {dimension_numbers = #tpu.dot_dimension_numbers<[1], [1], [0], [0], [0, 0, 1, 0], [], []>} : vector<8x8xbf16>, vector<8x8xbf16>, vector<8x8xf32> -> vector<8x8xf32>
    %cst_9 = arith.constant dense<0xFF800000> : vector<8xf32>
    %9 = vector.multi_reduction <maximumf>, %8, %cst_9 [1] : vector<8x8xf32> to vector<8xf32>
    %10 = vector.shape_cast %9 : vector<8xf32> to vector<8x1xf32>
    %11 = vector.broadcast %10 : vector<8x1xf32> to vector<8x8xf32>
    %12 = arith.subf %8, %11 : vector<8x8xf32>
    %13 = math.exp %12 : vector<8x8xf32>
    %cst_10 = arith.constant dense<0.000000e+00> : vector<8xf32>
    %14 = vector.multi_reduction <add>, %13, %cst_10 [1] : vector<8x8xf32> to vector<8xf32>
    %15 = vector.shape_cast %14 : vector<8xf32> to vector<8x1xf32>
    %16 = tpu.reciprocal %15 {approx = true} : vector<8x1xf32> -> vector<8x1xf32>
    %17 = vector.broadcast %16 : vector<8x1xf32> to vector<8x8xf32>
    %18 = arith.mulf %13, %17 : vector<8x8xf32>
    %19 = arith.truncf %18 : vector<8x8xf32> to vector<8x8xbf16>
    %cst_11 = arith.constant dense<0.000000e+00> : vector<8x8xf32>
    %20 = tpu.matmul %19, %7, %cst_11 {dimension_numbers = #tpu.dot_dimension_numbers<[1], [0], [0], [1], [0, 0, 1, 1], [], []>} : vector<8x8xbf16>, vector<8x8xbf16>, vector<8x8xf32> -> vector<8x8xf32>
    %21 = arith.truncf %20 : vector<8x8xf32> to vector<8x8xbf16>
    %c0_12 = arith.constant 0 : index
    %c0_13 = arith.constant 0 : index
    %c0_14 = arith.constant 0 : index
    %22 = vector.load %arg4[%c0_12, %c0_13, %c0_14] : memref<1x8x32xbf16, #tpu.memory_space<vmem>>, vector<1x8x8xbf16>
    %23 = vector.shape_cast %22 : vector<1x8x8xbf16> to vector<8x8xbf16>
    %24 = vector.shape_cast %21 : vector<8x8xbf16> to vector<1x8x8xbf16>
    tpu.vector_store %arg4[%c0_12, %c0_13, %c0_14], %24 {strides = array<i32>} : memref<1x8x32xbf16, #tpu.memory_space<vmem>>, vector<1x8x8xbf16>,
    %c0_15 = arith.constant 0 : index
    %c0_16 = arith.constant 0 : index
    %c8 = arith.constant 8 : index
    %25 = vector.load %arg1[%c0_15, %c0_16, %c8] : memref<1x8x32xbf16, #tpu.memory_space<vmem>>, vector<1x8x8xbf16>
    %26 = vector.shape_cast %25 : vector<1x8x8xbf16> to vector<8x8xbf16>
    %cst_17 = arith.constant 3.535160e-01 : bf16
    %27 = vector.broadcast %cst_17 : bf16 to vector<8x8xbf16>
    %28 = arith.mulf %26, %27 : vector<8x8xbf16>
    %c0_18 = arith.constant 0 : index
    %c0_19 = arith.constant 0 : index
    %c8_20 = arith.constant 8 : index
    %29 = vector.load %arg2[%c0_18, %c0_19, %c8_20] : memref<1x8x32xbf16, #tpu.memory_space<vmem>>, vector<1x8x8xbf16>
    %30 = vector.shape_cast %29 : vector<1x8x8xbf16> to vector<8x8xbf16>
    %c0_21 = arith.constant 0 : index
    %c0_22 = arith.constant 0 : index
    %c8_23 = arith.constant 8 : index
    %31 = vector.load %arg3[%c0_21, %c0_22, %c8_23] : memref<1x8x32xbf16, #tpu.memory_space<vmem>>, vector<1x8x8xbf16>
    %32 = vector.shape_cast %31 : vector<1x8x8xbf16> to vector<8x8xbf16>
    %cst_24 = arith.constant dense<0.000000e+00> : vector<8x8xf32>
    %33 = tpu.matmul %28, %30, %cst_24 {dimension_numbers = #tpu.dot_dimension_numbers<[1], [1], [0], [0], [0, 0, 1, 0], [], []>} : vector<8x8xbf16>, vector<8x8xbf16>, vector<8x8xf32> -> vector<8x8xf32>
    %cst_25 = arith.constant dense<0xFF800000> : vector<8xf32>
    %34 = vector.multi_reduction <maximumf>, %33, %cst_25 [1] : vector<8x8xf32> to vector<8xf32>
    %35 = vector.shape_cast %34 : vector<8xf32> to vector<8x1xf32>
    %36 = vector.broadcast %35 : vector<8x1xf32> to vector<8x8xf32>
    %37 = arith.subf %33, %36 : vector<8x8xf32>
    %38 = math.exp %37 : vector<8x8xf32>
    %cst_26 = arith.constant dense<0.000000e+00> : vector<8xf32>
    %39 = vector.multi_reduction <add>, %38, %cst_26 [1] : vector<8x8xf32> to vector<8xf32>
    %40 = vector.shape_cast %39 : vector<8xf32> to vector<8x1xf32>
    %41 = tpu.reciprocal %40 {approx = true} : vector<8x1xf32> -> vector<8x1xf32>
    %42 = vector.broadcast %41 : vector<8x1xf32> to vector<8x8xf32>
    %43 = arith.mulf %38, %42 : vector<8x8xf32>
    %44 = arith.truncf %43 : vector<8x8xf32> to vector<8x8xbf16>
    %cst_27 = arith.constant dense<0.000000e+00> : vector<8x8xf32>
    %45 = tpu.matmul %44, %32, %cst_27 {dimension_numbers = #tpu.dot_dimension_numbers<[1], [0], [0], [1], [0, 0, 1, 1], [], []>} : vector<8x8xbf16>, vector<8x8xbf16>, vector<8x8xf32> -> vector<8x8xf32>
    %46 = arith.truncf %45 : vector<8x8xf32> to vector<8x8xbf16>
    %c0_28 = arith.constant 0 : index
    %c0_29 = arith.constant 0 : index
    %c8_30 = arith.constant 8 : index
    %47 = vector.load %arg4[%c0_28, %c0_29, %c8_30] : memref<1x8x32xbf16, #tpu.memory_space<vmem>>, vector<1x8x8xbf16>
    %48 = vector.shape_cast %47 : vector<1x8x8xbf16> to vector<8x8xbf16>
    %49 = vector.shape_cast %46 : vector<8x8xbf16> to vector<1x8x8xbf16>
    tpu.vector_store %arg4[%c0_28, %c0_29, %c8_30], %49 {strides = array<i32>} : memref<1x8x32xbf16, #tpu.memory_space<vmem>>, vector<1x8x8xbf16>,
    %c0_31 = arith.constant 0 : index
    %c0_32 = arith.constant 0 : index
    %c16 = arith.constant 16 : index
    %50 = vector.load %arg1[%c0_31, %c0_32, %c16] : memref<1x8x32xbf16, #tpu.memory_space<vmem>>, vector<1x8x8xbf16>
    %51 = vector.shape_cast %50 : vector<1x8x8xbf16> to vector<8x8xbf16>
    %cst_33 = arith.constant 3.535160e-01 : bf16
    %52 = vector.broadcast %cst_33 : bf16 to vector<8x8xbf16>
    %53 = arith.mulf %51, %52 : vector<8x8xbf16>
    %c0_34 = arith.constant 0 : index
    %c0_35 = arith.constant 0 : index
    %c16_36 = arith.constant 16 : index
    %54 = vector.load %arg2[%c0_34, %c0_35, %c16_36] : memref<1x8x32xbf16, #tpu.memory_space<vmem>>, vector<1x8x8xbf16>
    %55 = vector.shape_cast %54 : vector<1x8x8xbf16> to vector<8x8xbf16>
    %c0_37 = arith.constant 0 : index
    %c0_38 = arith.constant 0 : index
    %c16_39 = arith.constant 16 : index
    %56 = vector.load %arg3[%c0_37, %c0_38, %c16_39] : memref<1x8x32xbf16, #tpu.memory_space<vmem>>, vector<1x8x8xbf16>
    %57 = vector.shape_cast %56 : vector<1x8x8xbf16> to vector<8x8xbf16>
    %cst_40 = arith.constant dense<0.000000e+00> : vector<8x8xf32>
    %58 = tpu.matmul %53, %55, %cst_40 {dimension_numbers = #tpu.dot_dimension_numbers<[1], [1], [0], [0], [0, 0, 1, 0], [], []>} : vector<8x8xbf16>, vector<8x8xbf16>, vector<8x8xf32> -> vector<8x8xf32>
    %cst_41 = arith.constant dense<0xFF800000> : vector<8xf32>
    %59 = vector.multi_reduction <maximumf>, %58, %cst_41 [1] : vector<8x8xf32> to vector<8xf32>
    %60 = vector.shape_cast %59 : vector<8xf32> to vector<8x1xf32>
    %61 = vector.broadcast %60 : vector<8x1xf32> to vector<8x8xf32>
    %62 = arith.subf %58, %61 : vector<8x8xf32>
    %63 = math.exp %62 : vector<8x8xf32>
    %cst_42 = arith.constant dense<0.000000e+00> : vector<8xf32>
    %64 = vector.multi_reduction <add>, %63, %cst_42 [1] : vector<8x8xf32> to vector<8xf32>
    %65 = vector.shape_cast %64 : vector<8xf32> to vector<8x1xf32>
    %66 = tpu.reciprocal %65 {approx = true} : vector<8x1xf32> -> vector<8x1xf32>
    %67 = vector.broadcast %66 : vector<8x1xf32> to vector<8x8xf32>
    %68 = arith.mulf %63, %67 : vector<8x8xf32>
    %69 = arith.truncf %68 : vector<8x8xf32> to vector<8x8xbf16>
    %cst_43 = arith.constant dense<0.000000e+00> : vector<8x8xf32>
    %70 = tpu.matmul %69, %57, %cst_43 {dimension_numbers = #tpu.dot_dimension_numbers<[1], [0], [0], [1], [0, 0, 1, 1], [], []>} : vector<8x8xbf16>, vector<8x8xbf16>, vector<8x8xf32> -> vector<8x8xf32>
    %71 = arith.truncf %70 : vector<8x8xf32> to vector<8x8xbf16>
    %c0_44 = arith.constant 0 : index
    %c0_45 = arith.constant 0 : index
    %c16_46 = arith.constant 16 : index
    %72 = vector.load %arg4[%c0_44, %c0_45, %c16_46] : memref<1x8x32xbf16, #tpu.memory_space<vmem>>, vector<1x8x8xbf16>
    %73 = vector.shape_cast %72 : vector<1x8x8xbf16> to vector<8x8xbf16>
    %74 = vector.shape_cast %71 : vector<8x8xbf16> to vector<1x8x8xbf16>
    tpu.vector_store %arg4[%c0_44, %c0_45, %c16_46], %74 {strides = array<i32>} : memref<1x8x32xbf16, #tpu.memory_space<vmem>>, vector<1x8x8xbf16>,
    %c0_47 = arith.constant 0 : index
    %c0_48 = arith.constant 0 : index
    %c24 = arith.constant 24 : index
    %75 = vector.load %arg1[%c0_47, %c0_48, %c24] : memref<1x8x32xbf16, #tpu.memory_space<vmem>>, vector<1x8x8xbf16>
    %76 = vector.shape_cast %75 : vector<1x8x8xbf16> to vector<8x8xbf16>
    %cst_49 = arith.constant 3.535160e-01 : bf16
    %77 = vector.broadcast %cst_49 : bf16 to vector<8x8xbf16>
    %78 = arith.mulf %76, %77 : vector<8x8xbf16>
    %c0_50 = arith.constant 0 : index
    %c0_51 = arith.constant 0 : index
    %c24_52 = arith.constant 24 : index
    %79 = vector.load %arg2[%c0_50, %c0_51, %c24_52] : memref<1x8x32xbf16, #tpu.memory_space<vmem>>, vector<1x8x8xbf16>
    %80 = vector.shape_cast %79 : vector<1x8x8xbf16> to vector<8x8xbf16>
    %c0_53 = arith.constant 0 : index
    %c0_54 = arith.constant 0 : index
    %c24_55 = arith.constant 24 : index
    %81 = vector.load %arg3[%c0_53, %c0_54, %c24_55] : memref<1x8x32xbf16, #tpu.memory_space<vmem>>, vector<1x8x8xbf16>
    %82 = vector.shape_cast %81 : vector<1x8x8xbf16> to vector<8x8xbf16>
    %cst_56 = arith.constant dense<0.000000e+00> : vector<8x8xf32>
    %83 = tpu.matmul %78, %80, %cst_56 {dimension_numbers = #tpu.dot_dimension_numbers<[1], [1], [0], [0], [0, 0, 1, 0], [], []>} : vector<8x8xbf16>, vector<8x8xbf16>, vector<8x8xf32> -> vector<8x8xf32>
    %cst_57 = arith.constant dense<0xFF800000> : vector<8xf32>
    %84 = vector.multi_reduction <maximumf>, %83, %cst_57 [1] : vector<8x8xf32> to vector<8xf32>
    %85 = vector.shape_cast %84 : vector<8xf32> to vector<8x1xf32>
    %86 = vector.broadcast %85 : vector<8x1xf32> to vector<8x8xf32>
    %87 = arith.subf %83, %86 : vector<8x8xf32>
    %88 = math.exp %87 : vector<8x8xf32>
    %cst_58 = arith.constant dense<0.000000e+00> : vector<8xf32>
    %89 = vector.multi_reduction <add>, %88, %cst_58 [1] : vector<8x8xf32> to vector<8xf32>
    %90 = vector.shape_cast %89 : vector<8xf32> to vector<8x1xf32>
    %91 = tpu.reciprocal %90 {approx = true} : vector<8x1xf32> -> vector<8x1xf32>
    %92 = vector.broadcast %91 : vector<8x1xf32> to vector<8x8xf32>
    %93 = arith.mulf %88, %92 : vector<8x8xf32>
    %94 = arith.truncf %93 : vector<8x8xf32> to vector<8x8xbf16>
    %cst_59 = arith.constant dense<0.000000e+00> : vector<8x8xf32>
    %95 = tpu.matmul %94, %82, %cst_59 {dimension_numbers = #tpu.dot_dimension_numbers<[1], [0], [0], [1], [0, 0, 1, 1], [], []>} : vector<8x8xbf16>, vector<8x8xbf16>, vector<8x8xf32> -> vector<8x8xf32>
    %96 = arith.truncf %95 : vector<8x8xf32> to vector<8x8xbf16>
    %c0_60 = arith.constant 0 : index
    %c0_61 = arith.constant 0 : index
    %c24_62 = arith.constant 24 : index
    %97 = vector.load %arg4[%c0_60, %c0_61, %c24_62] : memref<1x8x32xbf16, #tpu.memory_space<vmem>>, vector<1x8x8xbf16>
    %98 = vector.shape_cast %97 : vector<1x8x8xbf16> to vector<8x8xbf16>
    %99 = vector.shape_cast %96 : vector<8x8xbf16> to vector<1x8x8xbf16>
    tpu.vector_store %arg4[%c0_60, %c0_61, %c24_62], %99 {strides = array<i32>} : memref<1x8x32xbf16, #tpu.memory_space<vmem>>, vector<1x8x8xbf16>,
    return
  }
  func.func @transform_0(%arg0: i32) -> (i32, i32, i32) {
    %c0_i32 = arith.constant 0 : i32
    %c0_i32_0 = arith.constant 0 : i32
    %c0_i32_1 = arith.constant 0 : i32
    return %arg0, %c0_i32, %c0_i32_0 : i32, i32, i32
  }
  func.func @transform_1(%arg0: i32) -> (i32, i32, i32) {
    %c0_i32 = arith.constant 0 : i32
    %c0_i32_0 = arith.constant 0 : i32
    %c0_i32_1 = arith.constant 0 : i32
    return %arg0, %c0_i32, %c0_i32_0 : i32, i32, i32
  }
  func.func @transform_2(%arg0: i32) -> (i32, i32, i32) {
    %c0_i32 = arith.constant 0 : i32
    %c0_i32_0 = arith.constant 0 : i32
    %c0_i32_1 = arith.constant 0 : i32
    return %arg0, %c0_i32, %c0_i32_0 : i32, i32, i32
  }
  func.func @transform_3(%arg0: i32) -> (i32, i32, i32) {
    %c0_i32 = arith.constant 0 : i32
    %c0_i32_0 = arith.constant 0 : i32
    %c0_i32_1 = arith.constant 0 : i32
    return %arg0, %c0_i32, %c0_i32_0 : i32, i32, i32
  }
}

module attributes {stable_mosaic.version = 11 : i64} {
  func.func @_linear_kernel(%arg0: i32, %arg1: i32, %arg2: memref<16x32xbf16, #tpu.memory_space<vmem>>, %arg3: memref<32x32xbf16, #tpu.memory_space<vmem>>, %arg4: memref<1x32xf32, #tpu.memory_space<vmem>>, %arg5: memref<16x32xf32, #tpu.memory_space<vmem>>) attributes {dimension_semantics = [#tpu.dimension_semantics<parallel>, #tpu.dimension_semantics<parallel>], iteration_bounds = array<i64: 1, 1>, scalar_prefetch = 0 : i64, scratch_operands = 0 : i64, tpu.core_type = #tpu.core_type<tc>, window_params = [{transform_indices = @transform_0, window_bounds = array<i64: 16, 32>}, {transform_indices = @transform_1, window_bounds = array<i64: 32, 32>}, {transform_indices = @transform_2, window_bounds = array<i64: 1, 32>}, {transform_indices = @transform_3, window_bounds = array<i64: 16, 32>}]} {
    %c0 = arith.constant 0 : index
    %c0_0 = arith.constant 0 : index
    %0 = vector.load %arg2[%c0, %c0_0] : memref<16x32xbf16, #tpu.memory_space<vmem>>, vector<16x32xbf16>
    %c0_1 = arith.constant 0 : index
    %c0_2 = arith.constant 0 : index
    %1 = vector.load %arg3[%c0_1, %c0_2] : memref<32x32xbf16, #tpu.memory_space<vmem>>, vector<32x32xbf16>
    %cst = arith.constant dense<0.000000e+00> : vector<16x32xf32>
    %2 = tpu.matmul %0, %1, %cst {dimension_numbers = #tpu.dot_dimension_numbers<[1], [1], [0], [0], [0, 0, 1, 0], [], []>} : vector<16x32xbf16>, vector<32x32xbf16>, vector<16x32xf32> -> vector<16x32xf32>
    %c0_3 = arith.constant 0 : index
    %c0_4 = arith.constant 0 : index
    %3 = vector.load %arg4[%c0_3, %c0_4] : memref<1x32xf32, #tpu.memory_space<vmem>>, vector<1x32xf32>
    %4 = vector.broadcast %3 : vector<1x32xf32> to vector<16x32xf32>
    %5 = arith.addf %2, %4 : vector<16x32xf32>
    %c0_5 = arith.constant 0 : index
    %c0_6 = arith.constant 0 : index
    %6 = vector.load %arg5[%c0_5, %c0_6] : memref<16x32xf32, #tpu.memory_space<vmem>>, vector<16x32xf32>
    tpu.vector_store %arg5[%c0_5, %c0_6], %5 {strides = array<i32>} : memref<16x32xf32, #tpu.memory_space<vmem>>, vector<16x32xf32>,
    return
  }
  func.func @transform_0(%arg0: i32, %arg1: i32) -> (i32, i32) {
    %c0_i32 = arith.constant 0 : i32
    %c0_i32_0 = arith.constant 0 : i32
    return %arg0, %c0_i32 : i32, i32
  }
  func.func @transform_1(%arg0: i32, %arg1: i32) -> (i32, i32) {
    %c0_i32 = arith.constant 0 : i32
    %c0_i32_0 = arith.constant 0 : i32
    return %arg1, %c0_i32 : i32, i32
  }
  func.func @transform_2(%arg0: i32, %arg1: i32) -> (i32, i32) {
    %c0_i32 = arith.constant 0 : i32
    %c0_i32_0 = arith.constant 0 : i32
    return %c0_i32, %arg1 : i32, i32
  }
  func.func @transform_3(%arg0: i32, %arg1: i32) -> (i32, i32) {
    %c0_i32 = arith.constant 0 : i32
    return %arg0, %arg1 : i32, i32
  }
}

</mosaic_0001>

<llo_original>
// kernel: multi_headed_attention.5
$region0: #{multi_headed_attention.5}
  #allocation0 [shape = 'u32[]', space=smem, size = 0x4, offset = 0x4, fixed_abs, tag = 'smem constant byte address 0x4 - core index']
  #allocation1 [shape = 'u32[144,128]{1,0:T(1,128)}', space=vmem, size = 0x12000, scoped, tag = 'internal scratch']
  %s0 = inlined_call_operand.vmem [shape: bf16[16,32], index: 0, kind: input, shape index: {}]
  %s1 = inlined_call_operand.vmem [shape: bf16[32,32], index: 1, kind: input, shape index: {}]
  %s2 = inlined_call_operand.vmem [shape: f32[1,32], index: 2, kind: input, shape index: {}]
  %s3 = inlined_call_operand.vmem [shape: bf16[16,32], index: 3, kind: output, shape index: {}]
  %s4 = sld [smem:[#allocation0]]
  $region22: #{multi_headed_attention.5} parent=0
    _
  %s6 = ssub.s32 1, %s4
  %s7 = scalar_select 0, %s6, %s4
  // Predicated region
  $region2: #{multi_headed_attention.5} parent=0 // pred_check
    _
  $region3: #{multi_headed_attention.5} parent=0 // pred_check_branch
    %9 = sbr.rel (0) target = $region5
  $region4: #{multi_headed_attention.5} parent=0 // pred_region
    _
  $region5: #{multi_headed_attention.5} parent=0 // pred_fallthru
    _
  // Predicated region
  $region6: #{multi_headed_attention.5} parent=0 // pred_check
    _
  $region7: #{multi_headed_attention.5} parent=0 // pred_check_branch
    %11 = sbr.rel (0) target = $region9
  $region8: #{multi_headed_attention.5} parent=0 // pred_region
    _
  $region9: #{multi_headed_attention.5} parent=0 // pred_fallthru
    _
  // Predicated region
  $region10: #{multi_headed_attention.5} parent=0 // pred_check
    _
  $region11: #{multi_headed_attention.5} parent=0 // pred_check_branch
    %13 = sbr.rel (0) target = $region13
  $region12: #{multi_headed_attention.5} parent=0 // pred_region
    _
  $region13: #{multi_headed_attention.5} parent=0 // pred_fallthru
    _
  %v15 = vld [vmem:[%s0] sm:$0xf]
  %v16 = vld [vmem:[%s0 + $0x4] sm:$0xf]
  %v17 = vld [vmem:[%s1] sm:$0xf]
  %v18 = vld [vmem:[%s1 + $0x4] sm:$0xf]
  %v19 = vld [vmem:[%s1 + $0x8] sm:$0xf]
  %v20 = vld [vmem:[%s1 + $0xc] sm:$0xf]
  %v21 = vld [vmem:[%s2] sm:$0x1]
  %v23 = vlaneseq
  %v24 = vshrl.u32 %v23, 7
  %v25 = vsub.s32 0, %v24
  %v26 = vrot.slane %v21, %v25
  %v30 = vunpack.c.l.b16 %v15
  %v31 = vunpack.c.l.b16 %v16
  %v32 = vpack.c.b16 %v31, %v30
  %v37 = vunpack.c.l.b16 %v17
  %v38 = vunpack.c.l.b16 %v18
  %v39 = vunpack.c.l.b16 %v19
  %v40 = vunpack.c.l.b16 %v20
  %v41 = vpack.c.b16 %v38, %v37
  %v42 = vpack.c.b16 %v40, %v39
  %vm43 = vcmask 261120
  %v45 = vsel %vm43, %v32, 0
  %v48 = vsel %vm43, %v41, 0
  %v51 = vsel %vm43, %v42, 0
  %53 = vmatprep.subr.bf16.mxu0 0
  %54 = vmatpush1.bf16.xpose.msra.mxu0 %v48
  %55 = vmatprep.subr.bf16.mxu0 0
  %56 = vmatpush1.bf16.xpose.msra.mxu0 %v51
  %57 = vmatprep.subr.bf16.mxu0 0
  %58 = vmatpush1.bf16.xpose.msra.mxu0 0
  %59 = vmatprep.subr.bf16.mxu0 0
  %60 = vmatpush1.bf16.xpose.msra.mxu0 0
  %61 = vmatprep.subr.bf16.mxu0 0
  %62 = vmatpush1.bf16.xpose.msra.mxu0 0
  %63 = vmatprep.subr.bf16.mxu0 0
  %64 = vmatpush1.bf16.xpose.msra.mxu0 0
  %65 = vmatprep.subr.bf16.mxu0 0
  %66 = vmatpush1.bf16.xpose.msra.mxu0 0
  %67 = vmatprep.subr.bf16.mxu0 0
  %68 = vmatpush1.bf16.xpose.msra.mxu0 0
  %69 = vmatprep.subr.bf16.mxu0 0
  %70 = vmatpush1.bf16.xpose.msra.mxu0 0
  %71 = vmatprep.subr.bf16.mxu0 0
  %72 = vmatpush1.bf16.xpose.msra.mxu0 0
  %73 = vmatprep.subr.bf16.mxu0 0
  %74 = vmatpush1.bf16.xpose.msra.mxu0 0
  %75 = vmatprep.subr.bf16.mxu0 0
  %76 = vmatpush1.bf16.xpose.msra.mxu0 0
  %77 = vmatprep.subr.bf16.mxu0 0
  %78 = vmatpush1.bf16.xpose.msra.mxu0 0
  %79 = vmatprep.subr.bf16.mxu0 0
  %80 = vmatpush1.bf16.xpose.msra.mxu0 0
  %81 = vmatprep.subr.bf16.mxu0 0
  %82 = vmatpush1.bf16.xpose.msra.mxu0 0
  %83 = vmatprep.subr.bf16.mxu0 0
  %84 = vmatpush1.bf16.xpose.msra.mxu0 0
  %85 = vmatprep.mubr.bf16.mxu0 0
  %86 = vmatmul.mubr.bf16.gmra.mrb[0].mxu0 %v45
  %v87 = vpop.f32.mrb[0].mxu0
  %v88 = vadd.f32 %v26, %v87
  %v89 = vpop.f32.mrb[0].mxu0
  %v90 = vpop.f32.mrb[0].mxu0
  %v91 = vadd.f32 %v26, %v90
  %v92 = vpop.f32.mrb[0].mxu0
  %93 = vdwg.mxu0
  %v94 = vpack.c.bf16 %v91, %v88
  %v96 = vunpack.c.l.b16 %v94
  %v97 = vunpack.c.h.b16 %v94
  %v98 = vpack.c.b16 %v96, %v96
  %v99 = vpack.c.b16 %v97, %v97
  %vm102 = vcmask 257024
  %103 = vst.msk [vmem:[%s3] sm:$0xf] %vm102, %v98
  %104 = vst.msk [vmem:[%s3 + $0x4] sm:$0xf] %vm102, %v99
  // Predicated region
  $region14: #{multi_headed_attention.5} parent=0 // pred_check
    _
  $region15: #{multi_headed_attention.5} parent=0 // pred_check_branch
    %106 = sbr.rel (0) target = $region17
  $region16: #{multi_headed_attention.5} parent=0 // pred_region
    _
  $region17: #{multi_headed_attention.5} parent=0 // pred_fallthru
    _
  // Predicated region
  $region18: #{multi_headed_attention.5} parent=0 // pred_check
    _
  $region19: #{multi_headed_attention.5} parent=0 // pred_check_branch
    %108 = sbr.rel (0) target = $region21
  $region20: #{multi_headed_attention.5} parent=0 // pred_region
    _
  $region21: #{multi_headed_attention.5} parent=0 // pred_fallthru
    _

// kernel: multi_headed_attention.9
$region0: #{multi_headed_attention.9}
  #allocation0 [shape = 'u32[]', space=smem, size = 0x4, offset = 0x4, fixed_abs, tag = 'smem constant byte address 0x4 - core index']
  #allocation1 [shape = 'u32[144,128]{1,0:T(1,128)}', space=vmem, size = 0x12000, scoped, tag = 'internal scratch']
  %s0 = inlined_call_operand.vmem [shape: bf16[16,32], index: 0, kind: input, shape index: {}]
  %s1 = inlined_call_operand.vmem [shape: bf16[32,32], index: 1, kind: input, shape index: {}]
  %s2 = inlined_call_operand.vmem [shape: f32[1,32], index: 2, kind: input, shape index: {}]
  %s3 = inlined_call_operand.hbm [shape: f32[16,32], index: 3, kind: output, shape index: {}]
  %s4 = sld [smem:[#allocation0]]
  $region22: #{multi_headed_attention.9} parent=0
    _
  %s6 = ssub.s32 1, %s4
  %s7 = scalar_select 0, %s6, %s4
  $region1: #{multi_headed_attention.9} parent=0
    #allocation2 [shape = 'u8[8192]{0}', space=vmem, size = 0x2000, scoped, tag = 'output window, operand 0, single buffered']
    #allocation3 [shape = 's32[1]{0}', space=sflag, size = 0x4, scoped, tag = 'scoped memory for multi_headed_attention.9']
    %8 = vsyncpa [#allocation3], 0
    // Predicated region
    $region2: #{multi_headed_attention.9} parent=1 // pred_check
      _
    $region3: #{multi_headed_attention.9} parent=1 // pred_check_branch
      %10 = sbr.rel (0) target = $region5
    $region4: #{multi_headed_attention.9} parent=1 // pred_region
      _
    $region5: #{multi_headed_attention.9} parent=1 // pred_fallthru
      _
    // Predicated region
    $region6: #{multi_headed_attention.9} parent=1 // pred_check
      _
    $region7: #{multi_headed_attention.9} parent=1 // pred_check_branch
      %12 = sbr.rel (0) target = $region9
    $region8: #{multi_headed_attention.9} parent=1 // pred_region
      _
    $region9: #{multi_headed_attention.9} parent=1 // pred_fallthru
      _
    // Predicated region
    $region10: #{multi_headed_attention.9} parent=1 // pred_check
      _
    $region11: #{multi_headed_attention.9} parent=1 // pred_check_branch
      %14 = sbr.rel (0) target = $region13
    $region12: #{multi_headed_attention.9} parent=1 // pred_region
      _
    $region13: #{multi_headed_attention.9} parent=1 // pred_fallthru
      _
    %v16 = vld [vmem:[%s0] sm:$0xf]
    %v17 = vld [vmem:[%s0 + $0x4] sm:$0xf]
    %v18 = vld [vmem:[%s1] sm:$0xf]
    %v19 = vld [vmem:[%s1 + $0x4] sm:$0xf]
    %v20 = vld [vmem:[%s1 + $0x8] sm:$0xf]
    %v21 = vld [vmem:[%s1 + $0xc] sm:$0xf]
    %v22 = vld [vmem:[%s2] sm:$0x1]
    %v24 = vlaneseq
    %v25 = vshrl.u32 %v24, 7
    %v26 = vsub.s32 0, %v25
    %v27 = vrot.slane %v22, %v26
    %v31 = vunpack.c.l.b16 %v16
    %v32 = vunpack.c.l.b16 %v17
    %v33 = vpack.c.b16 %v32, %v31
    %v38 = vunpack.c.l.b16 %v18
    %v39 = vunpack.c.l.b16 %v19
    %v40 = vunpack.c.l.b16 %v20
    %v41 = vunpack.c.l.b16 %v21
    %v42 = vpack.c.b16 %v39, %v38
    %v43 = vpack.c.b16 %v41, %v40
    %vm44 = vcmask 261120
    %v46 = vsel %vm44, %v33, 0
    %v49 = vsel %vm44, %v42, 0
    %v52 = vsel %vm44, %v43, 0
    %54 = vmatprep.subr.bf16.mxu0 0
    %55 = vmatpush1.bf16.xpose.msra.mxu0 %v49
    %56 = vmatprep.subr.bf16.mxu0 0
    %57 = vmatpush1.bf16.xpose.msra.mxu0 %v52
    %58 = vmatprep.subr.bf16.mxu0 0
    %59 = vmatpush1.bf16.xpose.msra.mxu0 0
    %60 = vmatprep.subr.bf16.mxu0 0
    %61 = vmatpush1.bf16.xpose.msra.mxu0 0
    %62 = vmatprep.subr.bf16.mxu0 0
    %63 = vmatpush1.bf16.xpose.msra.mxu0 0
    %64 = vmatprep.subr.bf16.mxu0 0
    %65 = vmatpush1.bf16.xpose.msra.mxu0 0
    %66 = vmatprep.subr.bf16.mxu0 0
    %67 = vmatpush1.bf16.xpose.msra.mxu0 0
    %68 = vmatprep.subr.bf16.mxu0 0
    %69 = vmatpush1.bf16.xpose.msra.mxu0 0
    %70 = vmatprep.subr.bf16.mxu0 0
    %71 = vmatpush1.bf16.xpose.msra.mxu0 0
    %72 = vmatprep.subr.bf16.mxu0 0
    %73 = vmatpush1.bf16.xpose.msra.mxu0 0
    %74 = vmatprep.subr.bf16.mxu0 0
    %75 = vmatpush1.bf16.xpose.msra.mxu0 0
    %76 = vmatprep.subr.bf16.mxu0 0
    %77 = vmatpush1.bf16.xpose.msra.mxu0 0
    %78 = vmatprep.subr.bf16.mxu0 0
    %79 = vmatpush1.bf16.xpose.msra.mxu0 0
    %80 = vmatprep.subr.bf16.mxu0 0
    %81 = vmatpush1.bf16.xpose.msra.mxu0 0
    %82 = vmatprep.subr.bf16.mxu0 0
    %83 = vmatpush1.bf16.xpose.msra.mxu0 0
    %84 = vmatprep.subr.bf16.mxu0 0
    %85 = vmatpush1.bf16.xpose.msra.mxu0 0
    %86 = vmatprep.mubr.bf16.mxu0 0
    %87 = vmatmul.mubr.bf16.gmra.mrb[0].mxu0 %v46
    %v88 = vpop.f32.mrb[0].mxu0
    %v89 = vadd.f32 %v27, %v88
    %v90 = vpop.f32.mrb[0].mxu0
    %v91 = vpop.f32.mrb[0].mxu0
    %v92 = vadd.f32 %v27, %v91
    %v93 = vpop.f32.mrb[0].mxu0
    %94 = vdwg.mxu0
    %95 = vst.msk [vmem:[#allocation2] sm:$0xff] %vm44, %v89
    %96 = vst.msk [vmem:[#allocation2 + $0x8] sm:$0xff] %vm44, %v92
    // Predicated region
    $region14: #{multi_headed_attention.9} parent=1 // pred_check
      _
    $region15: #{multi_headed_attention.9} parent=1 // pred_check_branch
      %98 = sbr.rel (0) target = $region17
    $region16: #{multi_headed_attention.9} parent=1 // pred_region
      %s100 = ssub.s32 256, 256
      %101 = vsyncadd [#allocation3], %s100
      %s102 = sshll.u32 [#allocation2], 4
      %s103 = int_to_ptr.vmem [resolvable:$true] %s102
      %108 = dma.vmem_to_hbm [thread:$0]  %s103, 256, %s3, [#allocation3], 128, 128, 8
    $region17: #{multi_headed_attention.9} parent=1 // pred_fallthru
      _
    // Predicated region
    $region18: #{multi_headed_attention.9} parent=1 // pred_check
      _
    $region19: #{multi_headed_attention.9} parent=1 // pred_check_branch
      %110 = sbr.rel (0) target = $region21
    $region20: #{multi_headed_attention.9} parent=1 // pred_region
      %111 = dma.done [#allocation3], 256
    $region21: #{multi_headed_attention.9} parent=1 // pred_fallthru
      _
    %112 = vsyncpa [#allocation3], 1

// kernel: multi_headed_attention.8
$region0: #{multi_headed_attention.8}
  #allocation0 [shape = 'u32[]', space=smem, size = 0x4, offset = 0x4, fixed_abs, tag = 'smem constant byte address 0x4 - core index']
  #allocation1 [shape = 'u32[144,128]{1,0:T(1,128)}', space=vmem, size = 0x12000, scoped, tag = 'internal scratch']
  %s0 = inlined_call_operand.vmem [shape: bf16[2,8,32], index: 0, kind: input, shape index: {}]
  %s1 = inlined_call_operand.vmem [shape: bf16[2,8,32], index: 1, kind: input, shape index: {}]
  %s2 = inlined_call_operand.vmem [shape: bf16[2,8,32], index: 2, kind: input, shape index: {}]
  %s3 = inlined_call_operand.vmem [shape: bf16[2,8,32], index: 3, kind: output, shape index: {}]
  %s4 = sld [smem:[#allocation0]]
  $region45: #{multi_headed_attention.8} parent=0
    _
  %s6 = ssub.s32 1, %s4
  %s7 = scalar_select 0, %s6, %s4
  loop: start=0, step=1, limit=4
  $region2: #{multi_headed_attention.8} parent=0 // loop_pre_header
    _
  $region3: #{multi_headed_attention.8} parent=0 // loop_header
    %s9 = sphi 0, %s13
    %p10 = scmp.ge.s32.totalorder %s9, 4
    %s19 = sphi 0, %s21
    %s22 = sphi 0, %s19
    %s23 = sphi 0, %s22
    %s39 = sphi 0, %s23
    %s45 = sphi 0, %s47
    %s48 = sphi 0, %s45
    %s49 = sphi 0, %s48
    %s65 = sphi 0, %s49
    %s71 = sphi 0, %s73
    %s74 = sphi 0, %s71
    %s75 = sphi 0, %s74
    %s91 = sphi 0, %s75
    %s97 = sphi 0, %s99
    %s100 = sphi 0, %s97
    %s101 = sphi 0, %s100
    %s117 = sphi 0, %s101
  $region4: #{multi_headed_attention.8} parent=0 // loop_header_branch
    %12 = sbr.rel (%p10) target = $region8
  $region5: #{multi_headed_attention.8} parent=0 // loop_body
    %s14 = ssub.s32 %s9, 1
    %s15 = ssub.s32 %s9, 2
    %s16 = sadd.s32 %s9, 1
    %s17 = ssub.s32 %s9, %s16
    %p18 = scmp.eq.s32.totalorder %s17, 0
    %s20 = sadd.s32 %s19, 1
    %s21 = scalar_select %p18, %s19, %s20
    %p24 = pneg %p18
    %p25 = scmp.eq.s32.totalorder %s9, 1
    %p26 = por %p24, %p25
    %p27 = scmp.ne.s32.totalorder %s19, %s22
    %p28 = scmp.eq.s32.totalorder %s9, 0
    %p29 = por %p27, %p28
    %p30 = scmp.ne.s32.totalorder %s19, %s22
    %p31 = scmp.eq.s32.totalorder %s14, 1
    %p32 = por %p30, %p31
    %p33 = scmp.ne.s32.totalorder %s22, %s23
    %p34 = scmp.eq.s32.totalorder %s14, 0
    %p35 = por %p33, %p34
    %p36 = scmp.ne.s32.totalorder %s22, %s23
    %p37 = scmp.eq.s32.totalorder %s15, 1
    %p38 = por %p36, %p37
    %p40 = scmp.ne.s32.totalorder %s23, %s39
    %p41 = scmp.eq.s32.totalorder %s15, 0
    %p42 = por %p40, %p41
    %s43 = ssub.s32 %s9, %s16
    %p44 = scmp.eq.s32.totalorder %s43, 0
    %s46 = sadd.s32 %s45, 1
    %s47 = scalar_select %p44, %s45, %s46
    %p50 = pneg %p44
    %p51 = scmp.eq.s32.totalorder %s9, 1
    %p52 = por %p50, %p51
    %p53 = scmp.ne.s32.totalorder %s45, %s48
    %p54 = scmp.eq.s32.totalorder %s9, 0
    %p55 = por %p53, %p54
    %p56 = scmp.ne.s32.totalorder %s45, %s48
    %p57 = scmp.eq.s32.totalorder %s14, 1
    %p58 = por %p56, %p57
    %p59 = scmp.ne.s32.totalorder %s48, %s49
    %p60 = scmp.eq.s32.totalorder %s14, 0
    %p61 = por %p59, %p60
    %p62 = scmp.ne.s32.totalorder %s48, %s49
    %p63 = scmp.eq.s32.totalorder %s15, 1
    %p64 = por %p62, %p63
    %p66 = scmp.ne.s32.totalorder %s49, %s65
    %p67 = scmp.eq.s32.totalorder %s15, 0
    %p68 = por %p66, %p67
    %s69 = ssub.s32 %s9, %s16
    %p70 = scmp.eq.s32.totalorder %s69, 0
    %s72 = sadd.s32 %s71, 1
    %s73 = scalar_select %p70, %s71, %s72
    %p76 = pneg %p70
    %p77 = scmp.eq.s32.totalorder %s9, 1
    %p78 = por %p76, %p77
    %p79 = scmp.ne.s32.totalorder %s71, %s74
    %p80 = scmp.eq.s32.totalorder %s9, 0
    %p81 = por %p79, %p80
    %p82 = scmp.ne.s32.totalorder %s71, %s74
    %p83 = scmp.eq.s32.totalorder %s14, 1
    %p84 = por %p82, %p83
    %p85 = scmp.ne.s32.totalorder %s74, %s75
    %p86 = scmp.eq.s32.totalorder %s14, 0
    %p87 = por %p85, %p86
    %p88 = scmp.ne.s32.totalorder %s74, %s75
    %p89 = scmp.eq.s32.totalorder %s15, 1
    %p90 = por %p88, %p89
    %p92 = scmp.ne.s32.totalorder %s75, %s91
    %p93 = scmp.eq.s32.totalorder %s15, 0
    %p94 = por %p92, %p93
    %s95 = ssub.s32 %s9, %s16
    %p96 = scmp.eq.s32.totalorder %s95, 0
    %s98 = sadd.s32 %s97, 1
    %s99 = scalar_select %p96, %s97, %s98
    %p102 = pneg %p96
    %p103 = scmp.eq.s32.totalorder %s9, 1
    %p104 = por %p102, %p103
    %p105 = scmp.ne.s32.totalorder %s97, %s100
    %p106 = scmp.eq.s32.totalorder %s9, 0
    %p107 = por %p105, %p106
    %p108 = scmp.ne.s32.totalorder %s97, %s100
    %p109 = scmp.eq.s32.totalorder %s14, 1
    %p110 = por %p108, %p109
    %p111 = scmp.ne.s32.totalorder %s100, %s101
    %p112 = scmp.eq.s32.totalorder %s14, 0
    %p113 = por %p111, %p112
    %p114 = scmp.ne.s32.totalorder %s100, %s101
    %p115 = scmp.eq.s32.totalorder %s15, 1
    %p116 = por %p114, %p115
    %p118 = scmp.ne.s32.totalorder %s101, %s117
    %p119 = scmp.eq.s32.totalorder %s15, 0
    %p120 = por %p118, %p119
    %p121 = scmp.le.s32.totalorder 1, %s9
    %p122 = scmp.lt.s32.totalorder %s9, 3
    %p123 = pnand %p121, %p122
    %p124 = pneg %p123
    // Predicated region
    $region9: #{multi_headed_attention.8} parent=5 // pred_check
      _
    $region10: #{multi_headed_attention.8} parent=5 // pred_check_branch
      %126 = sbr.rel (%p123) target = $region12
    $region11: #{multi_headed_attention.8} parent=5 // pred_region
      %s127 = ssub.s32 %s9, 1
    $region12: #{multi_headed_attention.8} parent=5 // pred_fallthru
      _
    %p128 = scmp.lt.s32.totalorder %s9, 2
    // Predicated region
    $region13: #{multi_headed_attention.8} parent=5 // pred_check
      %p129 = pneg %p128
    $region14: #{multi_headed_attention.8} parent=5 // pred_check_branch
      %131 = sbr.rel (%p129) target = $region16
    $region15: #{multi_headed_attention.8} parent=5 // pred_region
      // Predicated region
      $region17: #{multi_headed_attention.8} parent=15 // pred_check
        %p132 = pneg %p29
      $region18: #{multi_headed_attention.8} parent=15 // pred_check_branch
        %134 = sbr.rel (%p132) target = $region20
      $region19: #{multi_headed_attention.8} parent=15 // pred_region
        %p135 = scmp.lt.s32.totalorder %s9, 1
        %s136 = scalar_select %p135, %s9, 1
        %s137 = smul.addr %s136, 4
        %s138 = scalar_lea.vmem %s0, %s137
      $region20: #{multi_headed_attention.8} parent=15 // pred_fallthru
        _
      // Predicated region
      $region21: #{multi_headed_attention.8} parent=15 // pred_check
        %p139 = pneg %p55
      $region22: #{multi_headed_attention.8} parent=15 // pred_check_branch
        %141 = sbr.rel (%p139) target = $region24
      $region23: #{multi_headed_attention.8} parent=15 // pred_region
        %p142 = scmp.lt.s32.totalorder %s9, 1
        %s143 = scalar_select %p142, %s9, 1
        %s144 = smul.addr %s143, 4
        %s145 = scalar_lea.vmem %s1, %s144
      $region24: #{multi_headed_attention.8} parent=15 // pred_fallthru
        _
      // Predicated region
      $region25: #{multi_headed_attention.8} parent=15 // pred_check
        %p146 = pneg %p81
      $region26: #{multi_headed_attention.8} parent=15 // pred_check_branch
        %148 = sbr.rel (%p146) target = $region28
      $region27: #{multi_headed_attention.8} parent=15 // pred_region
        %p149 = scmp.lt.s32.totalorder %s9, 1
        %s150 = scalar_select %p149, %s9, 1
        %s151 = smul.addr %s150, 4
        %s152 = scalar_lea.vmem %s2, %s151
      $region28: #{multi_headed_attention.8} parent=15 // pred_fallthru
        _
    $region16: #{multi_headed_attention.8} parent=5 // pred_fallthru
      _
    %p153 = scmp.le.s32.totalorder 1, %s9
    %p154 = scmp.lt.s32.totalorder %s9, 3
    %p155 = pnand %p153, %p154
    %p156 = pneg %p155
    // Predicated region
    $region29: #{multi_headed_attention.8} parent=5 // pred_check
      _
    $region30: #{multi_headed_attention.8} parent=5 // pred_check_branch
      %158 = sbr.rel (%p155) target = $region32
    $region31: #{multi_headed_attention.8} parent=5 // pred_region
      %s159 = ssub.s32 %s9, 1
      %p160 = scmp.lt.s32.totalorder %s14, 1
      %s161 = scalar_select %p160, %s14, 1
      %s162 = smul.addr %s161, 4
      %s163 = scalar_lea.vmem %s0, %s162
      %p164 = pneg %p35
      %p165 = pneg %p32
      %p166 = scmp.lt.s32.totalorder %s14, 1
      %s167 = scalar_select %p166, %s14, 1
      %s168 = smul.addr %s167, 4
      %s169 = scalar_lea.vmem %s1, %s168
      %p170 = pneg %p61
      %p171 = pneg %p58
      %p172 = scmp.lt.s32.totalorder %s14, 1
      %s173 = scalar_select %p172, %s14, 1
      %s174 = smul.addr %s173, 4
      %s175 = scalar_lea.vmem %s2, %s174
      %p176 = pneg %p87
      %p177 = pneg %p84
      %p178 = pneg %p113
      %p179 = pneg %p110
      %p180 = scmp.lt.s32.totalorder %s14, 1
      %s181 = scalar_select %p180, %s14, 1
      %s182 = smul.addr %s181, 4
      %s183 = scalar_lea.vmem %s3, %s182
      %p184 = scmp.lt.s32.totalorder %s14, 1
      %s185 = scalar_select %p184, %s14, 1
      %s186 = smul.addr %s185, 4
      %s187 = scalar_lea.vmem %s0, %s186
      %p188 = scmp.lt.s32.totalorder %s14, 1
      %s189 = scalar_select %p188, %s14, 1
      %s190 = smul.addr %s189, 4
      %s191 = scalar_lea.vmem %s1, %s190
      %p192 = scmp.lt.s32.totalorder %s14, 1
      %s193 = scalar_select %p192, %s14, 1
      %s194 = smul.addr %s193, 4
      %s195 = scalar_lea.vmem %s2, %s194
      %p196 = scmp.lt.s32.totalorder %s14, 1
      %s197 = scalar_select %p196, %s14, 1
      %s198 = smul.addr %s197, 4
      %s199 = scalar_lea.vmem %s3, %s198
      %v202 = vld [vmem:[%s187] sm:$0xf]
      %v203 = vmul.bf16 %v202, 1052065461
      %v204 = vld [vmem:[%s191] sm:$0xf]
      %v205 = vld [vmem:[%s195] sm:$0xf]
      %vm206 = vcmask 64512
      %v208 = vsel %vm206, %v203, 0
      %v211 = vsel %vm206, %v204, 0
      %213 = vmatprep.subr.bf16.mxu0 0
      %214 = vmatpush1.bf16.xpose.msra.mxu0 %v211
      %215 = vmatprep.subr.bf16.mxu0 0
      %216 = vmatpush1.bf16.xpose.msra.mxu0 0
      %217 = vmatprep.subr.bf16.mxu0 0
      %218 = vmatpush1.bf16.xpose.msra.mxu0 0
      %219 = vmatprep.subr.bf16.mxu0 0
      %220 = vmatpush1.bf16.xpose.msra.mxu0 0
      %221 = vmatprep.subr.bf16.mxu0 0
      %222 = vmatpush1.bf16.xpose.msra.mxu0 0
      %223 = vmatprep.subr.bf16.mxu0 0
      %224 = vmatpush1.bf16.xpose.msra.mxu0 0
      %225 = vmatprep.subr.bf16.mxu0 0
      %226 = vmatpush1.bf16.xpose.msra.mxu0 0
      %227 = vmatprep.subr.bf16.mxu0 0
      %228 = vmatpush1.bf16.xpose.msra.mxu0 0
      %229 = vmatprep.subr.bf16.mxu0 0
      %230 = vmatpush1.bf16.xpose.msra.mxu0 0
      %231 = vmatprep.subr.bf16.mxu0 0
      %232 = vmatpush1.bf16.xpose.msra.mxu0 0
      %233 = vmatprep.subr.bf16.mxu0 0
      %234 = vmatpush1.bf16.xpose.msra.mxu0 0
      %235 = vmatprep.subr.bf16.mxu0 0
      %236 = vmatpush1.bf16.xpose.msra.mxu0 0
      %237 = vmatprep.subr.bf16.mxu0 0
      %238 = vmatpush1.bf16.xpose.msra.mxu0 0
      %239 = vmatprep.subr.bf16.mxu0 0
      %240 = vmatpush1.bf16.xpose.msra.mxu0 0
      %241 = vmatprep.subr.bf16.mxu0 0
      %242 = vmatpush1.bf16.xpose.msra.mxu0 0
      %243 = vmatprep.subr.bf16.mxu0 0
      %244 = vmatpush1.bf16.xpose.msra.mxu0 0
      %245 = vmatprep.mubr.bf16.mxu0 0
      %246 = vmatmul.mubr.bf16.gmra.mrb[0].mxu0 %v208
      %v247 = vpop.f32.mrb[0].mxu0
      %v248 = vadd.f32 0.0, %v247
      %v249 = vpop.f32.mrb[0].mxu0
      %v250 = vpop.f32.mrb[0].mxu0
      %v251 = vpop.f32.mrb[0].mxu0
      %252 = vdwg.mxu0
      %v253 = vsel %vm206, %v248, -inf
      %254 = vmax.xlane.f32.xlu0 %v253
      %v255 = vpop.xlane.xlu0 %254
      %v256 = vsub.f32 %v248, %v255
      %v257 = vmul.f32 %v256, 1.442695
      %v258 = vpow.pop %v257
      %v259 = vsel %vm206, %v258, 0.0
      %260 = vadd.xlane.f32.xlu0 %v259
      %v261 = vpop.xlane.xlu0 %260
      %v262 = vrcp.pop %v261
      %v263 = vmul.f32 %v258, %v262
      %v264 = vpack.c.bf16 %v263, %v263
      %v266 = vsel %vm206, %v264, 0
      %vm268 = vcmask 1043456
      %v270 = vsel %vm268, %v205, 0
      %272 = vmatprep.subr.bf16.mxu0 0
      %273 = vmatpush1.bf16.msra.mxu0 %v270
      %274 = vmatprep.subr.bf16.mxu0 0
      %275 = vmatpush1.bf16.msra.mxu0 0
      %276 = vmatprep.subr.bf16.mxu0 0
      %277 = vmatpush1.bf16.msra.mxu0 0
      %278 = vmatprep.subr.bf16.mxu0 0
      %279 = vmatpush1.bf16.msra.mxu0 0
      %280 = vmatprep.subr.bf16.mxu0 0
      %281 = vmatpush1.bf16.msra.mxu0 0
      %282 = vmatprep.subr.bf16.mxu0 0
      %283 = vmatpush1.bf16.msra.mxu0 0
      %284 = vmatprep.subr.bf16.mxu0 0
      %285 = vmatpush1.bf16.msra.mxu0 0
      %286 = vmatprep.subr.bf16.mxu0 0
      %287 = vmatpush1.bf16.msra.mxu0 0
      %288 = vmatprep.subr.bf16.mxu0 0
      %289 = vmatpush1.bf16.msra.mxu0 0
      %290 = vmatprep.subr.bf16.mxu0 0
      %291 = vmatpush1.bf16.msra.mxu0 0
      %292 = vmatprep.subr.bf16.mxu0 0
      %293 = vmatpush1.bf16.msra.mxu0 0
      %294 = vmatprep.subr.bf16.mxu0 0
      %295 = vmatpush1.bf16.msra.mxu0 0
      %296 = vmatprep.subr.bf16.mxu0 0
      %297 = vmatpush1.bf16.msra.mxu0 0
      %298 = vmatprep.subr.bf16.mxu0 0
      %299 = vmatpush1.bf16.msra.mxu0 0
      %300 = vmatprep.subr.bf16.mxu0 0
      %301 = vmatpush1.bf16.msra.mxu0 0
      %302 = vmatprep.subr.bf16.mxu0 0
      %303 = vmatpush1.bf16.msra.mxu0 0
      %304 = vmatprep.mubr.bf16.mxu0 0
      %305 = vmatmul.mubr.bf16.gmra.mrb[0].mxu0 %v266
      %v306 = vpop.f32.mrb[0].mxu0
      %v307 = vadd.f32 0.0, %v306
      %v308 = vpop.f32.mrb[0].mxu0
      %v309 = vpop.f32.mrb[0].mxu0
      %v310 = vpop.f32.mrb[0].mxu0
      %311 = vdwg.mxu0
      %v312 = vpack.c.bf16 %v307, %v307
      %vm313 = vcmask 60416
      %314 = vst.msk [vmem:[%s199] sm:$0xf] %vm313, %v312
      %v315 = vld [vmem:[%s187] sm:$0xf]
      %v316 = vmul.bf16 %v315, 1052065461
      %v317 = vld [vmem:[%s191] sm:$0xf]
      %v318 = vld [vmem:[%s195] sm:$0xf]
      %v320 = vunpack.c.l.b16 %v316
      %v321 = vpack.c.b16 %v320, %v320
      %322 = vrot.lane.b32.xlu0 %v321, 120
      %v323 = vpop.permute.xlu0 %322
      %v325 = vunpack.c.l.b16 %v317
      %v326 = vpack.c.b16 %v325, %v325
      %327 = vrot.lane.b32.xlu0 %v326, 120
      %v328 = vpop.permute.xlu0 %327
      %v330 = vsel %vm206, %v323, 0
      %v333 = vsel %vm206, %v328, 0
      %335 = vmatprep.subr.bf16.mxu0 0
      %336 = vmatpush1.bf16.xpose.msra.mxu0 %v333
      %337 = vmatprep.subr.bf16.mxu0 0
      %338 = vmatpush1.bf16.xpose.msra.mxu0 0
      %339 = vmatprep.subr.bf16.mxu0 0
      %340 = vmatpush1.bf16.xpose.msra.mxu0 0
      %341 = vmatprep.subr.bf16.mxu0 0
      %342 = vmatpush1.bf16.xpose.msra.mxu0 0
      %343 = vmatprep.subr.bf16.mxu0 0
      %344 = vmatpush1.bf16.xpose.msra.mxu0 0
      %345 = vmatprep.subr.bf16.mxu0 0
      %346 = vmatpush1.bf16.xpose.msra.mxu0 0
      %347 = vmatprep.subr.bf16.mxu0 0
      %348 = vmatpush1.bf16.xpose.msra.mxu0 0
      %349 = vmatprep.subr.bf16.mxu0 0
      %350 = vmatpush1.bf16.xpose.msra.mxu0 0
      %351 = vmatprep.subr.bf16.mxu0 0
      %352 = vmatpush1.bf16.xpose.msra.mxu0 0
      %353 = vmatprep.subr.bf16.mxu0 0
      %354 = vmatpush1.bf16.xpose.msra.mxu0 0
      %355 = vmatprep.subr.bf16.mxu0 0
      %356 = vmatpush1.bf16.xpose.msra.mxu0 0
      %357 = vmatprep.subr.bf16.mxu0 0
      %358 = vmatpush1.bf16.xpose.msra.mxu0 0
      %359 = vmatprep.subr.bf16.mxu0 0
      %360 = vmatpush1.bf16.xpose.msra.mxu0 0
      %361 = vmatprep.subr.bf16.mxu0 0
      %362 = vmatpush1.bf16.xpose.msra.mxu0 0
      %363 = vmatprep.subr.bf16.mxu0 0
      %364 = vmatpush1.bf16.xpose.msra.mxu0 0
      %365 = vmatprep.subr.bf16.mxu0 0
      %366 = vmatpush1.bf16.xpose.msra.mxu0 0
      %367 = vmatprep.mubr.bf16.mxu0 0
      %368 = vmatmul.mubr.bf16.gmra.mrb[0].mxu0 %v330
      %v369 = vpop.f32.mrb[0].mxu0
      %v370 = vadd.f32 0.0, %v369
      %v371 = vpop.f32.mrb[0].mxu0
      %v372 = vpop.f32.mrb[0].mxu0
      %v373 = vpop.f32.mrb[0].mxu0
      %374 = vdwg.mxu0
      %v375 = vsel %vm206, %v370, -inf
      %376 = vmax.xlane.f32.xlu0 %v375
      %v377 = vpop.xlane.xlu0 %376
      %v378 = vsub.f32 %v370, %v377
      %v379 = vmul.f32 %v378, 1.442695
      %v380 = vpow.pop %v379
      %v381 = vsel %vm206, %v380, 0.0
      %382 = vadd.xlane.f32.xlu0 %v381
      %v383 = vpop.xlane.xlu0 %382
      %v384 = vrcp.pop %v383
      %v385 = vmul.f32 %v380, %v384
      %v386 = vpack.c.bf16 %v385, %v385
      %v388 = vunpack.c.l.b16 %v318
      %v389 = vpack.c.b16 %v388, %v388
      %390 = vrot.lane.b32.xlu0 %v389, 120
      %v391 = vpop.permute.xlu0 %390
      %v393 = vsel %vm206, %v386, 0
      %v396 = vsel %vm268, %v391, 0
      %398 = vmatprep.subr.bf16.mxu0 0
      %399 = vmatpush1.bf16.msra.mxu0 %v396
      %400 = vmatprep.subr.bf16.mxu0 0
      %401 = vmatpush1.bf16.msra.mxu0 0
      %402 = vmatprep.subr.bf16.mxu0 0
      %403 = vmatpush1.bf16.msra.mxu0 0
      %404 = vmatprep.subr.bf16.mxu0 0
      %405 = vmatpush1.bf16.msra.mxu0 0
      %406 = vmatprep.subr.bf16.mxu0 0
      %407 = vmatpush1.bf16.msra.mxu0 0
      %408 = vmatprep.subr.bf16.mxu0 0
      %409 = vmatpush1.bf16.msra.mxu0 0
      %410 = vmatprep.subr.bf16.mxu0 0
      %411 = vmatpush1.bf16.msra.mxu0 0
      %412 = vmatprep.subr.bf16.mxu0 0
      %413 = vmatpush1.bf16.msra.mxu0 0
      %414 = vmatprep.subr.bf16.mxu0 0
      %415 = vmatpush1.bf16.msra.mxu0 0
      %416 = vmatprep.subr.bf16.mxu0 0
      %417 = vmatpush1.bf16.msra.mxu0 0
      %418 = vmatprep.subr.bf16.mxu0 0
      %419 = vmatpush1.bf16.msra.mxu0 0
      %420 = vmatprep.subr.bf16.mxu0 0
      %421 = vmatpush1.bf16.msra.mxu0 0
      %422 = vmatprep.subr.bf16.mxu0 0
      %423 = vmatpush1.bf16.msra.mxu0 0
      %424 = vmatprep.subr.bf16.mxu0 0
      %425 = vmatpush1.bf16.msra.mxu0 0
      %426 = vmatprep.subr.bf16.mxu0 0
      %427 = vmatpush1.bf16.msra.mxu0 0
      %428 = vmatprep.subr.bf16.mxu0 0
      %429 = vmatpush1.bf16.msra.mxu0 0
      %430 = vmatprep.mubr.bf16.mxu0 0
      %431 = vmatmul.mubr.bf16.gmra.mrb[0].mxu0 %v393
      %v432 = vpop.f32.mrb[0].mxu0
      %v433 = vadd.f32 0.0, %v432
      %v434 = vpop.f32.mrb[0].mxu0
      %v435 = vpop.f32.mrb[0].mxu0
      %v436 = vpop.f32.mrb[0].mxu0
      %437 = vdwg.mxu0
      %v438 = vpack.c.bf16 %v433, %v433
      %v440 = vunpack.c.l.b16 %v438
      %v441 = vpack.c.b16 %v440, %v440
      %442 = vrot.lane.b32.xlu0 %v441, 8
      %v443 = vpop.permute.xlu0 %442
      %vm445 = vcmask 126016
      %446 = vst.msk [vmem:[%s199] sm:$0xf] %vm445, %v443
      %v447 = vld [vmem:[%s187] sm:$0xf]
      %v448 = vmul.bf16 %v447, 1052065461
      %v449 = vld [vmem:[%s191] sm:$0xf]
      %v450 = vld [vmem:[%s195] sm:$0xf]
      %v452 = vunpack.c.l.b16 %v448
      %v453 = vpack.c.b16 %v452, %v452
      %454 = vrot.lane.b32.xlu0 %v453, 112
      %v455 = vpop.permute.xlu0 %454
      %v457 = vunpack.c.l.b16 %v449
      %v458 = vpack.c.b16 %v457, %v457
      %459 = vrot.lane.b32.xlu0 %v458, 112
      %v460 = vpop.permute.xlu0 %459
      %v462 = vsel %vm206, %v455, 0
      %v465 = vsel %vm206, %v460, 0
      %467 = vmatprep.subr.bf16.mxu0 0
      %468 = vmatpush1.bf16.xpose.msra.mxu0 %v465
      %469 = vmatprep.subr.bf16.mxu0 0
      %470 = vmatpush1.bf16.xpose.msra.mxu0 0
      %471 = vmatprep.subr.bf16.mxu0 0
      %472 = vmatpush1.bf16.xpose.msra.mxu0 0
      %473 = vmatprep.subr.bf16.mxu0 0
      %474 = vmatpush1.bf16.xpose.msra.mxu0 0
      %475 = vmatprep.subr.bf16.mxu0 0
      %476 = vmatpush1.bf16.xpose.msra.mxu0 0
      %477 = vmatprep.subr.bf16.mxu0 0
      %478 = vmatpush1.bf16.xpose.msra.mxu0 0
      %479 = vmatprep.subr.bf16.mxu0 0
      %480 = vmatpush1.bf16.xpose.msra.mxu0 0
      %481 = vmatprep.subr.bf16.mxu0 0
      %482 = vmatpush1.bf16.xpose.msra.mxu0 0
      %483 = vmatprep.subr.bf16.mxu0 0
      %484 = vmatpush1.bf16.xpose.msra.mxu0 0
      %485 = vmatprep.subr.bf16.mxu0 0
      %486 = vmatpush1.bf16.xpose.msra.mxu0 0
      %487 = vmatprep.subr.bf16.mxu0 0
      %488 = vmatpush1.bf16.xpose.msra.mxu0 0
      %489 = vmatprep.subr.bf16.mxu0 0
      %490 = vmatpush1.bf16.xpose.msra.mxu0 0
      %491 = vmatprep.subr.bf16.mxu0 0
      %492 = vmatpush1.bf16.xpose.msra.mxu0 0
      %493 = vmatprep.subr.bf16.mxu0 0
      %494 = vmatpush1.bf16.xpose.msra.mxu0 0
      %495 = vmatprep.subr.bf16.mxu0 0
      %496 = vmatpush1.bf16.xpose.msra.mxu0 0
      %497 = vmatprep.subr.bf16.mxu0 0
      %498 = vmatpush1.bf16.xpose.msra.mxu0 0
      %499 = vmatprep.mubr.bf16.mxu0 0
      %500 = vmatmul.mubr.bf16.gmra.mrb[0].mxu0 %v462
      %v501 = vpop.f32.mrb[0].mxu0
      %v502 = vadd.f32 0.0, %v501
      %v503 = vpop.f32.mrb[0].mxu0
      %v504 = vpop.f32.mrb[0].mxu0
      %v505 = vpop.f32.mrb[0].mxu0
      %506 = vdwg.mxu0
      %v507 = vsel %vm206, %v502, -inf
      %508 = vmax.xlane.f32.xlu0 %v507
      %v509 = vpop.xlane.xlu0 %508
      %v510 = vsub.f32 %v502, %v509
      %v511 = vmul.f32 %v510, 1.442695
      %v512 = vpow.pop %v511
      %v513 = vsel %vm206, %v512, 0.0
      %514 = vadd.xlane.f32.xlu0 %v513
      %v515 = vpop.xlane.xlu0 %514
      %v516 = vrcp.pop %v515
      %v517 = vmul.f32 %v512, %v516
      %v518 = vpack.c.bf16 %v517, %v517
      %v520 = vunpack.c.l.b16 %v450
      %v521 = vpack.c.b16 %v520, %v520
      %522 = vrot.lane.b32.xlu0 %v521, 112
      %v523 = vpop.permute.xlu0 %522
      %v525 = vsel %vm206, %v518, 0
      %v528 = vsel %vm268, %v523, 0
      %530 = vmatprep.subr.bf16.mxu0 0
      %531 = vmatpush1.bf16.msra.mxu0 %v528
      %532 = vmatprep.subr.bf16.mxu0 0
      %533 = vmatpush1.bf16.msra.mxu0 0
      %534 = vmatprep.subr.bf16.mxu0 0
      %535 = vmatpush1.bf16.msra.mxu0 0
      %536 = vmatprep.subr.bf16.mxu0 0
      %537 = vmatpush1.bf16.msra.mxu0 0
      %538 = vmatprep.subr.bf16.mxu0 0
      %539 = vmatpush1.bf16.msra.mxu0 0
      %540 = vmatprep.subr.bf16.mxu0 0
      %541 = vmatpush1.bf16.msra.mxu0 0
      %542 = vmatprep.subr.bf16.mxu0 0
      %543 = vmatpush1.bf16.msra.mxu0 0
      %544 = vmatprep.subr.bf16.mxu0 0
      %545 = vmatpush1.bf16.msra.mxu0 0
      %546 = vmatprep.subr.bf16.mxu0 0
      %547 = vmatpush1.bf16.msra.mxu0 0
      %548 = vmatprep.subr.bf16.mxu0 0
      %549 = vmatpush1.bf16.msra.mxu0 0
      %550 = vmatprep.subr.bf16.mxu0 0
      %551 = vmatpush1.bf16.msra.mxu0 0
      %552 = vmatprep.subr.bf16.mxu0 0
      %553 = vmatpush1.bf16.msra.mxu0 0
      %554 = vmatprep.subr.bf16.mxu0 0
      %555 = vmatpush1.bf16.msra.mxu0 0
      %556 = vmatprep.subr.bf16.mxu0 0
      %557 = vmatpush1.bf16.msra.mxu0 0
      %558 = vmatprep.subr.bf16.mxu0 0
      %559 = vmatpush1.bf16.msra.mxu0 0
      %560 = vmatprep.subr.bf16.mxu0 0
      %561 = vmatpush1.bf16.msra.mxu0 0
      %562 = vmatprep.mubr.bf16.mxu0 0
      %563 = vmatmul.mubr.bf16.gmra.mrb[0].mxu0 %v525
      %v564 = vpop.f32.mrb[0].mxu0
      %v565 = vadd.f32 0.0, %v564
      %v566 = vpop.f32.mrb[0].mxu0
      %v567 = vpop.f32.mrb[0].mxu0
      %v568 = vpop.f32.mrb[0].mxu0
      %569 = vdwg.mxu0
      %v570 = vpack.c.bf16 %v565, %v565
      %v572 = vunpack.c.l.b16 %v570
      %v573 = vpack.c.b16 %v572, %v572
      %574 = vrot.lane.b32.xlu0 %v573, 16
      %v575 = vpop.permute.xlu0 %574
      %vm577 = vcmask 191616
      %578 = vst.msk [vmem:[%s199] sm:$0xf] %vm577, %v575
      %v579 = vld [vmem:[%s187] sm:$0xf]
      %v580 = vmul.bf16 %v579, 1052065461
      %v581 = vld [vmem:[%s191] sm:$0xf]
      %v582 = vld [vmem:[%s195] sm:$0xf]
      %v584 = vunpack.c.l.b16 %v580
      %v585 = vpack.c.b16 %v584, %v584
      %586 = vrot.lane.b32.xlu0 %v585, 104
      %v587 = vpop.permute.xlu0 %586
      %v589 = vunpack.c.l.b16 %v581
      %v590 = vpack.c.b16 %v589, %v589
      %591 = vrot.lane.b32.xlu0 %v590, 104
      %v592 = vpop.permute.xlu0 %591
      %v594 = vsel %vm206, %v587, 0
      %v597 = vsel %vm206, %v592, 0
      %599 = vmatprep.subr.bf16.mxu0 0
      %600 = vmatpush1.bf16.xpose.msra.mxu0 %v597
      %601 = vmatprep.subr.bf16.mxu0 0
      %602 = vmatpush1.bf16.xpose.msra.mxu0 0
      %603 = vmatprep.subr.bf16.mxu0 0
      %604 = vmatpush1.bf16.xpose.msra.mxu0 0
      %605 = vmatprep.subr.bf16.mxu0 0
      %606 = vmatpush1.bf16.xpose.msra.mxu0 0
      %607 = vmatprep.subr.bf16.mxu0 0
      %608 = vmatpush1.bf16.xpose.msra.mxu0 0
      %609 = vmatprep.subr.bf16.mxu0 0
      %610 = vmatpush1.bf16.xpose.msra.mxu0 0
      %611 = vmatprep.subr.bf16.mxu0 0
      %612 = vmatpush1.bf16.xpose.msra.mxu0 0
      %613 = vmatprep.subr.bf16.mxu0 0
      %614 = vmatpush1.bf16.xpose.msra.mxu0 0
      %615 = vmatprep.subr.bf16.mxu0 0
      %616 = vmatpush1.bf16.xpose.msra.mxu0 0
      %617 = vmatprep.subr.bf16.mxu0 0
      %618 = vmatpush1.bf16.xpose.msra.mxu0 0
      %619 = vmatprep.subr.bf16.mxu0 0
      %620 = vmatpush1.bf16.xpose.msra.mxu0 0
      %621 = vmatprep.subr.bf16.mxu0 0
      %622 = vmatpush1.bf16.xpose.msra.mxu0 0
      %623 = vmatprep.subr.bf16.mxu0 0
      %624 = vmatpush1.bf16.xpose.msra.mxu0 0
      %625 = vmatprep.subr.bf16.mxu0 0
      %626 = vmatpush1.bf16.xpose.msra.mxu0 0
      %627 = vmatprep.subr.bf16.mxu0 0
      %628 = vmatpush1.bf16.xpose.msra.mxu0 0
      %629 = vmatprep.subr.bf16.mxu0 0
      %630 = vmatpush1.bf16.xpose.msra.mxu0 0
      %631 = vmatprep.mubr.bf16.mxu0 0
      %632 = vmatmul.mubr.bf16.gmra.mrb[0].mxu0 %v594
      %v633 = vpop.f32.mrb[0].mxu0
      %v634 = vadd.f32 0.0, %v633
      %v635 = vpop.f32.mrb[0].mxu0
      %v636 = vpop.f32.mrb[0].mxu0
      %v637 = vpop.f32.mrb[0].mxu0
      %638 = vdwg.mxu0
      %v639 = vsel %vm206, %v634, -inf
      %640 = vmax.xlane.f32.xlu0 %v639
      %v641 = vpop.xlane.xlu0 %640
      %v642 = vsub.f32 %v634, %v641
      %v643 = vmul.f32 %v642, 1.442695
      %v644 = vpow.pop %v643
      %v645 = vsel %vm206, %v644, 0.0
      %646 = vadd.xlane.f32.xlu0 %v645
      %v647 = vpop.xlane.xlu0 %646
      %v648 = vrcp.pop %v647
      %v649 = vmul.f32 %v644, %v648
      %v650 = vpack.c.bf16 %v649, %v649
      %v652 = vunpack.c.l.b16 %v582
      %v653 = vpack.c.b16 %v652, %v652
      %654 = vrot.lane.b32.xlu0 %v653, 104
      %v655 = vpop.permute.xlu0 %654
      %v657 = vsel %vm206, %v650, 0
      %v660 = vsel %vm268, %v655, 0
      %662 = vmatprep.subr.bf16.mxu0 0
      %663 = vmatpush1.bf16.msra.mxu0 %v660
      %664 = vmatprep.subr.bf16.mxu0 0
      %665 = vmatpush1.bf16.msra.mxu0 0
      %666 = vmatprep.subr.bf16.mxu0 0
      %667 = vmatpush1.bf16.msra.mxu0 0
      %668 = vmatprep.subr.bf16.mxu0 0
      %669 = vmatpush1.bf16.msra.mxu0 0
      %670 = vmatprep.subr.bf16.mxu0 0
      %671 = vmatpush1.bf16.msra.mxu0 0
      %672 = vmatprep.subr.bf16.mxu0 0
      %673 = vmatpush1.bf16.msra.mxu0 0
      %674 = vmatprep.subr.bf16.mxu0 0
      %675 = vmatpush1.bf16.msra.mxu0 0
      %676 = vmatprep.subr.bf16.mxu0 0
      %677 = vmatpush1.bf16.msra.mxu0 0
      %678 = vmatprep.subr.bf16.mxu0 0
      %679 = vmatpush1.bf16.msra.mxu0 0
      %680 = vmatprep.subr.bf16.mxu0 0
      %681 = vmatpush1.bf16.msra.mxu0 0
      %682 = vmatprep.subr.bf16.mxu0 0
      %683 = vmatpush1.bf16.msra.mxu0 0
      %684 = vmatprep.subr.bf16.mxu0 0
      %685 = vmatpush1.bf16.msra.mxu0 0
      %686 = vmatprep.subr.bf16.mxu0 0
      %687 = vmatpush1.bf16.msra.mxu0 0
      %688 = vmatprep.subr.bf16.mxu0 0
      %689 = vmatpush1.bf16.msra.mxu0 0
      %690 = vmatprep.subr.bf16.mxu0 0
      %691 = vmatpush1.bf16.msra.mxu0 0
      %692 = vmatprep.subr.bf16.mxu0 0
      %693 = vmatpush1.bf16.msra.mxu0 0
      %694 = vmatprep.mubr.bf16.mxu0 0
      %695 = vmatmul.mubr.bf16.gmra.mrb[0].mxu0 %v657
      %v696 = vpop.f32.mrb[0].mxu0
      %v697 = vadd.f32 0.0, %v696
      %v698 = vpop.f32.mrb[0].mxu0
      %v699 = vpop.f32.mrb[0].mxu0
      %v700 = vpop.f32.mrb[0].mxu0
      %701 = vdwg.mxu0
      %v702 = vpack.c.bf16 %v697, %v697
      %v704 = vunpack.c.l.b16 %v702
      %v705 = vpack.c.b16 %v704, %v704
      %706 = vrot.lane.b32.xlu0 %v705, 24
      %v707 = vpop.permute.xlu0 %706
      %vm709 = vcmask 257216
      %710 = vst.msk [vmem:[%s199] sm:$0xf] %vm709, %v707
      %p711 = scmp.lt.s32.totalorder %s14, 1
      %s712 = scalar_select %p711, %s14, 1
      %s713 = smul.addr %s712, 4
      %s714 = scalar_lea.vmem %s3, %s713
      // Predicated region
      $region33: #{multi_headed_attention.8} parent=31 // pred_check
        %p715 = pneg %p110
      $region34: #{multi_headed_attention.8} parent=31 // pred_check_branch
        %717 = sbr.rel (%p715) target = $region36
      $region35: #{multi_headed_attention.8} parent=31 // pred_region
        _
      $region36: #{multi_headed_attention.8} parent=31 // pred_fallthru
        _
    $region32: #{multi_headed_attention.8} parent=5 // pred_fallthru
      _
    %p718 = scmp.le.s32.totalorder 2, %s9
    // Predicated region
    $region37: #{multi_headed_attention.8} parent=5 // pred_check
      %p719 = pneg %p718
    $region38: #{multi_headed_attention.8} parent=5 // pred_check_branch
      %721 = sbr.rel (%p719) target = $region40
    $region39: #{multi_headed_attention.8} parent=5 // pred_region
      %s722 = ssub.s32 %s9, 2
      // Predicated region
      $region41: #{multi_headed_attention.8} parent=39 // pred_check
        %p723 = pneg %p116
      $region42: #{multi_headed_attention.8} parent=39 // pred_check_branch
        %725 = sbr.rel (%p723) target = $region44
      $region43: #{multi_headed_attention.8} parent=39 // pred_region
        %p726 = scmp.lt.s32.totalorder %s15, 1
        %s727 = scalar_select %p726, %s15, 1
        %s728 = smul.addr %s727, 4
        %s729 = scalar_lea.vmem %s3, %s728
      $region44: #{multi_headed_attention.8} parent=39 // pred_fallthru
        _
    $region40: #{multi_headed_attention.8} parent=5 // pred_fallthru
      _
  $region6: #{multi_headed_attention.8} parent=0 // loop_footer
    %s13 = sadd.s32 1, %s9
  $region7: #{multi_headed_attention.8} parent=0 // loop_footer_branch
    %8 = sbr.rel target = $region3
  $region8: #{multi_headed_attention.8} parent=0 // loop_exit
    _

</llo_original>
